<compile_context>
chip_gen: v7x
topology: tpu7x:2x2x1
jax: 0.10.0
libtpu: 0.0.40
codegen_flags: <defaults>
</compile_context>

<pallas_src>
import jax
import jax.numpy as jnp
from jax.experimental import pallas as pl
from jax.experimental.pallas import tpu as pltpu

_INV_SQRT2 = 0.7071067811865476


def _cdiv(a, b):
    return -(-a // b)


def _round_up(x, m):
    return _cdiv(x, m) * m


def _vmem_capacity_bytes():
    try:
        cap = int(pltpu.get_tpu_info().vmem_capacity_bytes)
        if cap <= 0:
            raise ValueError("bad vmem capacity")
        return min(cap, 128 * 1024 * 1024)
    except Exception:
        return 64 * 1024 * 1024  # conservative (v7x-sized) fallback


def _make_pwconv_kernel(act, fused_bias, k_tiled, gelu_approx, cast_x_dtype):
    """Builds the kernel body.

    Refs (non K-tiled):      x(tci==C_in, ts), w(tco, C_in), [b(tco,1)], o(tco, ts)
    Refs (K-tiled, +scratch): x(tci, ts), w(tco, tci), [b(tco,1)], o(tco, ts), acc(tco, ts)
    """

    def _x(x_ref):
        xv = x_ref[...]
        if cast_x_dtype is not None:
            xv = xv.astype(cast_x_dtype)
        return xv

    def _epilogue(y, bias):
        y = y + bias  # (tco, ts) + (tco, 1) lane-broadcast
        if act == "gelu":
            if gelu_approx:
                # tanh approximation runs on the EUP slot (cheaper epilogue).
                y = jax.nn.gelu(y, approximate=True)
            else:
                # PyTorch nn.GELU() default = exact erf formulation.
                y = 0.5 * y * (1.0 + jax.lax.erf(y * _INV_SQRT2))
        elif act == "relu":
            y = jnp.maximum(y, 0.0)
        else:
            raise ValueError(f"unsupported act: {act}")
        return y

    if not k_tiled:
        if not fused_bias:

            def kernel(x_ref, w_ref, o_ref):
                y = jnp.dot(w_ref[...], _x(x_ref),
                            preferred_element_type=jnp.float32)
                o_ref[...] = y.astype(o_ref.dtype)

            return kernel

        def kernel(x_ref, w_ref, b_ref, o_ref):
            y = jnp.dot(w_ref[...], _x(x_ref),
                        preferred_element_type=jnp.float32)
            o_ref[...] = _epilogue(y, b_ref[...]).astype(o_ref.dtype)

        return kernel

    # ---- C_in (K) tiled: accumulate in f32 VMEM scratch, k axis is innermost.
    if not fused_bias:

        def kernel(x_ref, w_ref, o_ref, acc_ref):
            @pl.when(pl.program_id(3) == 0)
            def _():
                acc_ref[...] = jnp.zeros_like(acc_ref)

            acc_ref[...] += jnp.dot(w_ref[...], _x(x_ref),
                                    preferred_element_type=jnp.float32)

            @pl.when(pl.program_id(3) == pl.num_programs(3) - 1)
            def _():
                o_ref[...] = acc_ref[...].astype(o_ref.dtype)

        return kernel

    def kernel(x_ref, w_ref, b_ref, o_ref, acc_ref):
        @pl.when(pl.program_id(3) == 0)
        def _():
            acc_ref[...] = jnp.zeros_like(acc_ref)

        acc_ref[...] += jnp.dot(w_ref[...], _x(x_ref),
                                preferred_element_type=jnp.float32)

        @pl.when(pl.program_id(3) == pl.num_programs(3) - 1)
        def _():
            o_ref[...] = _epilogue(acc_ref[...], b_ref[...]).astype(o_ref.dtype)

    return kernel


def _choose_tiles(C_in, C_out, S, budget, tile_s, tile_co, tile_ci):
    """Pick (ts, tco, tci) so double-buffered tiles fit the VMEM budget.

    Preference order: large lane tiles > untiled channels > C_out tiling
    (cheap now that c is innermost) > C_in (K) tiling > lane tiles below 512.
    """
    itemsize = 4

    def need(ts, tco, tci, ktiled):
        b = itemsize * (2 * tci * ts + 2 * tco * tci + 2 * tco * ts + 2 * tco)
        if ktiled:
            b += itemsize * tco * ts  # f32 accumulator scratch
        return b

    # Spatial (lane) tile candidates: full S, else lane-dense multiples of 128.
    if tile_s is not None:
        cap = max(128, int(tile_s))
        ts_cands = ([S] if S <= cap else []) + [
            t for t in (4096, 2048, 1024, 512, 256, 128) if t < S and t <= cap]
        if not ts_cands:
            ts_cands = [128]
    else:
        ts_cands = [S] + [t for t in (4096, 2048, 1024, 512, 256, 128) if t < S]

    # Output-channel (sublane) tile candidates.
    if tile_co is not None:
        tco_cands = [min(_round_up(int(tile_co), 8), C_out)]
    else:
        tco_cands = [C_out] + [t for t in (512, 256, 128) if t < C_out]

    # Input-channel (contraction) tile candidates: must divide C_in exactly so
    # no out-of-bounds garbage ever reaches the accumulator.
    if tile_ci is not None and int(tile_ci) < C_in and C_in % int(tile_ci) == 0:
        tci_cands = [int(tile_ci)]
    else:
        tci_cands = [C_in] + [t for t in (1024, 512, 256, 128)
                              if t < C_in and C_in % t == 0]

    for min_ts in (512, 128):
        for tci in tci_cands:
            for tco in tco_cands:
                for ts in ts_cands:
                    if ts < min_ts and ts != S:
                        continue
                    if need(ts, tco, tci, tci != C_in) <= budget:
                        return ts, tco, tci
    # Last resort: smallest everything (may exceed budget on absurd shapes).
    return ts_cands[-1], tco_cands[-1], tci_cands[-1]


def pwconv(x_nchw, weight, act=None, bn_params=None, *,
           tile_s=None, tile_co=None, tile_ci=None,
           compute_dtype=None, gelu_approx=False):
    """Forward pass of PWConv (kernel_size=1, stride=1, padding=0, groups=1).

    x_nchw: (N, C_in, H, W) float32
    weight: (C_out, C_in, 1, 1) float32   (Conv2d weight, bias=False)
    act:    None | 'gelu' | 'relu'
    bn_params: dict(gamma, beta, running_mean, running_var, eps) when act != None
    tile_s / tile_co / tile_ci: optional tile overrides (else auto from VMEM budget).
    compute_dtype: optional matmul operand dtype (e.g. jnp.bfloat16); epilogue stays f32.
    """
    N, C_in, H, W = x_nchw.shape
    C_out = weight.shape[0]
    S = H * W

    # ---- weight prep + BN folding (inference semantics) --------------------
    w = weight.reshape(C_out, C_in).astype(jnp.float32)
    if act is not None:
        g = bn_params["gamma"]
        b = bn_params["beta"]
        mu = bn_params["running_mean"]
        var = bn_params["running_var"]
        eps = bn_params.get("eps", 1e-5)
        scale = g / jnp.sqrt(var + eps)                  # (C_out,)
        bias = (b - mu * scale).reshape(C_out, 1).astype(jnp.float32)
        w = w * scale[:, None]                           # fold scale into weight
    else:
        bias = None
    if compute_dtype is not None:
        w = w.astype(compute_dtype)

    # ---- NCHW -> (N, C_in, S): pure view, no transpose / HBM copy ----------
    x3 = x_nchw.reshape(N, C_in, S)

    # ---- generation-aware VMEM budget + tile selection ----------------------
    vmem_cap = _vmem_capacity_bytes()
    budget = int(0.80 * vmem_cap)
    ts, tco, tci = _choose_tiles(C_in, C_out, S, budget, tile_s, tile_co, tile_ci)

    n_s = _cdiv(S, ts)
    n_c = _cdiv(C_out, tco)
    n_k = C_in // tci
    k_tiled = tci != C_in

    # v7x has 2 TensorCores: guarantee >=2 grid steps on a parallel axis.
    if tile_s is None and N * n_s * n_c * n_k == 1 and S >= 256:
        ts = _round_up(_cdiv(S, 2), 128)
        n_s = _cdiv(S, ts)

    # ---- grid / specs -------------------------------------------------------
    if not k_tiled:
        grid = (N, n_s, n_c)                 # c innermost: x tile resident over c
        x_spec = pl.BlockSpec((pl.Squeezed(), C_in, ts), lambda n, j, c: (n, 0, j))
        w_spec = pl.BlockSpec((tco, C_in), lambda n, j, c: (c, 0))
        b_spec = pl.BlockSpec((tco, 1), lambda n, j, c: (c, 0))
        o_spec = pl.BlockSpec((pl.Squeezed(), tco, ts), lambda n, j, c: (n, c, j))
        semantics = ("parallel", "parallel", "parallel")
        scratch = []
    else:
        grid = (N, n_s, n_c, n_k)            # k innermost: reduction axis
        x_spec = pl.BlockSpec((pl.Squeezed(), tci, ts), lambda n, j, c, k: (n, k, j))
        w_spec = pl.BlockSpec((tco, tci), lambda n, j, c, k: (c, k))
        b_spec = pl.BlockSpec((tco, 1), lambda n, j, c, k: (c, 0))
        o_spec = pl.BlockSpec((pl.Squeezed(), tco, ts), lambda n, j, c, k: (n, c, j))
        semantics = ("parallel", "parallel", "parallel", "arbitrary")
        scratch = [pltpu.VMEM((tco, ts), jnp.float32)]

    in_specs = [x_spec, w_spec]
    operands = [x3, w]
    if bias is not None:
        in_specs.append(b_spec)
        operands.append(bias)

    # VMEM limit: leave headroom for compiler scratch (never request full VMEM).
    itemsize = 4
    need = itemsize * (2 * tci * ts + 2 * tco * tci + 2 * tco * ts + 2 * tco)
    if k_tiled:
        need += itemsize * tco * ts
    vmem_limit = int(min(0.85 * vmem_cap, max(2 * need, 32 * 1024 * 1024)))

    cost = pl.CostEstimate(
        flops=2 * N * S * C_in * C_out,
        transcendentals=(N * S * C_out) if act == "gelu" else 0,
        bytes_accessed=itemsize * (N * S * C_in + C_in * C_out + N * S * C_out),
    )

    out3 = pl.pallas_call(
        _make_pwconv_kernel(act, bias is not None, k_tiled, gelu_approx,
                            compute_dtype),
        out_shape=jax.ShapeDtypeStruct((N, C_out, S), x_nchw.dtype),
        grid_spec=pltpu.PrefetchScalarGridSpec(
            num_scalar_prefetch=0,
            grid=grid,
            in_specs=in_specs,
            out_specs=o_spec,
            scratch_shapes=scratch,
        ),
        compiler_params=pltpu.CompilerParams(
            dimension_semantics=semantics,
            vmem_limit_bytes=vmem_limit,
        ),
        cost_estimate=cost,
    )(*operands)

    return out3.reshape(N, C_out, H, W)


def _reference(x_nchw, weight, act, bn_params):
    """Pure-JAX reference for correctness checking (transpose path)."""
    N, C_in, H, W = x_nchw.shape
    C_out = weight.shape[0]
    x2d = jnp.transpose(x_nchw, (0, 2, 3, 1)).reshape(-1, C_in)
    y = x2d @ weight.reshape(C_out, C_in).T
    if act is not None:
        g, b = bn_params["gamma"], bn_params["beta"]
        mu, var = bn_params["running_mean"], bn_params["running_var"]
        eps = bn_params.get("eps", 1e-5)
        y = (y - mu) / jnp.sqrt(var + eps) * g + b
        if act == "gelu":
            y = 0.5 * y * (1.0 + jax.lax.erf(y / jnp.sqrt(2.0)))
        elif act == "relu":
            y = jnp.maximum(y, 0.0)
    return jnp.transpose(y.reshape(N, H, W, C_out), (0, 3, 1, 2))


def _make_bn(key, c):
    k1, k2, k3, k4 = jax.random.split(key, 4)
    return {
        "gamma": 1.0 + 0.1 * jax.random.normal(k1, (c,), dtype=jnp.float32),
        "beta": 0.1 * jax.random.normal(k2, (c,), dtype=jnp.float32),
        "running_mean": 0.05 * jax.random.normal(k3, (c,), dtype=jnp.float32),
        "running_var": jnp.abs(
            1.0 + 0.1 * jax.random.normal(k4, (c,), dtype=jnp.float32)),
        "eps": 1e-5,
    }


if __name__ == "__main__":
    key = jax.random.PRNGKey(0)
    k_x, k_w, k_bn, k_x2, k_x4, k_w4, k_bn4 = jax.random.split(key, 7)

    # ---- Cases 1-3: small channels, auto tiling -----------------------------
    N, C_in, H, W = 2, 4, 16, 16
    C_out = 8
    x = jax.random.normal(k_x, (N, C_in, H, W), dtype=jnp.float32)
    weight = jax.random.normal(k_w, (C_out, C_in, 1, 1), dtype=jnp.float32) * 0.1
    bn_params = _make_bn(k_bn, C_out)

    # Case 1: act=None -> pure 1x1 conv (bn/act are Identity in the module).
    out_none = jax.block_until_ready(pwconv(x, weight, act=None))
    ref_none = _reference(x, weight, None, None)

    # Case 2: act='gelu' -> conv + BatchNorm2d (inference) + exact-erf GELU.
    # TODO(synk): PyTorch BatchNorm2d in training mode uses batch statistics;
    #             here we model inference (running stats) semantics.
    out_gelu = jax.block_until_ready(pwconv(x, weight, act="gelu", bn_params=bn_params))
    ref_gelu = _reference(x, weight, "gelu", bn_params)

    # Case 3: act='relu' on a non-128-multiple spatial size with a forced small
    # spatial tile: exercises the ragged-boundary masked-store path (no pad/slice).
    H2, W2 = 18, 18
    x2 = jax.random.normal(k_x2, (N, C_in, H2, W2), dtype=jnp.float32)
    out_relu = jax.block_until_ready(
        pwconv(x2, weight, act="relu", bn_params=bn_params, tile_s=128))
    ref_relu = _reference(x2, weight, "relu", bn_params)

    # Case 4: forced C_out tiling (ragged) + C_in (K) tiling with accumulator.
    C_in4, C_out4 = 256, 192
    x4 = jax.random.normal(k_x4, (N, C_in4, H, W), dtype=jnp.float32)
    w4 = jax.random.normal(k_w4, (C_out4, C_in4, 1, 1), dtype=jnp.float32) * 0.05
    bn4 = _make_bn(k_bn4, C_out4)
    out_kt = jax.block_until_ready(
        pwconv(x4, w4, act="relu", bn_params=bn4,
               tile_s=128, tile_co=128, tile_ci=128))
    ref_kt = _reference(x4, w4, "relu", bn4)

    assert out_none.shape == (N, C_out, H, W)
    assert out_gelu.shape == (N, C_out, H, W)
    assert out_relu.shape == (N, C_out, H2, W2)
    assert out_kt.shape == (N, C_out4, H, W)
    assert jnp.allclose(out_none, ref_none, atol=1e-5, rtol=1e-5)
    assert jnp.allclose(out_gelu, ref_gelu, atol=1e-5, rtol=1e-5)
    assert jnp.allclose(out_relu, ref_relu, atol=1e-5, rtol=1e-5)
    assert jnp.allclose(out_kt, ref_kt, atol=2e-2, rtol=2e-2)

    print("KERNEL_OK")
</pallas_src>

<mosaic_0001>
module attributes {stable_mosaic.version = 11 : i64} {
  func.func @kernel(%arg0: i32, %arg1: i32, %arg2: i32, %arg3: memref<1x4x256xf32, #tpu.memory_space<vmem>>, %arg4: memref<8x4xf32, #tpu.memory_space<vmem>>, %arg5: memref<1x8x256xf32, #tpu.memory_space<vmem>>) attributes {dimension_semantics = [#tpu.dimension_semantics<parallel>, #tpu.dimension_semantics<parallel>, #tpu.dimension_semantics<parallel>], iteration_bounds = array<i64: 2, 1, 1>, scalar_prefetch = 0 : i64, scratch_operands = 0 : i64, tpu.core_type = #tpu.core_type<tc>, window_params = [{transform_indices = @transform_0, window_bounds = array<i64: 1, 4, 256>}, {transform_indices = @transform_1, window_bounds = array<i64: 8, 4>}, {transform_indices = @transform_2, window_bounds = array<i64: 1, 8, 256>}]} {
    %c0 = arith.constant 0 : index
    %c0_0 = arith.constant 0 : index
    %0 = vector.load %arg4[%c0, %c0_0] : memref<8x4xf32, #tpu.memory_space<vmem>>, vector<8x4xf32>
    %c0_1 = arith.constant 0 : index
    %c0_2 = arith.constant 0 : index
    %c0_3 = arith.constant 0 : index
    %1 = vector.load %arg3[%c0_1, %c0_2, %c0_3] : memref<1x4x256xf32, #tpu.memory_space<vmem>>, vector<1x4x256xf32>
    %2 = vector.shape_cast %1 : vector<1x4x256xf32> to vector<4x256xf32>
    %cst = arith.constant dense<0.000000e+00> : vector<8x256xf32>
    %3 = tpu.matmul %0, %2, %cst {dimension_numbers = #tpu.dot_dimension_numbers<[1], [0], [0], [1], [0, 0, 1, 1], [], []>} : vector<8x4xf32>, vector<4x256xf32>, vector<8x256xf32> -> vector<8x256xf32>
    %c0_4 = arith.constant 0 : index
    %c0_5 = arith.constant 0 : index
    %c0_6 = arith.constant 0 : index
    %4 = vector.load %arg5[%c0_4, %c0_5, %c0_6] : memref<1x8x256xf32, #tpu.memory_space<vmem>>, vector<1x8x256xf32>
    %5 = vector.shape_cast %4 : vector<1x8x256xf32> to vector<8x256xf32>
    %6 = vector.shape_cast %3 : vector<8x256xf32> to vector<1x8x256xf32>
    tpu.vector_store %arg5[%c0_4, %c0_5, %c0_6], %6 {strides = array<i32>} : memref<1x8x256xf32, #tpu.memory_space<vmem>>, vector<1x8x256xf32>,
    return
  }
  func.func @transform_0(%arg0: i32, %arg1: i32, %arg2: i32) -> (i32, i32, i32) {
    %c0_i32 = arith.constant 0 : i32
    %c0_i32_0 = arith.constant 0 : i32
    return %arg0, %c0_i32, %arg1 : i32, i32, i32
  }
  func.func @transform_1(%arg0: i32, %arg1: i32, %arg2: i32) -> (i32, i32) {
    %c0_i32 = arith.constant 0 : i32
    %c0_i32_0 = arith.constant 0 : i32
    return %arg2, %c0_i32 : i32, i32
  }
  func.func @transform_2(%arg0: i32, %arg1: i32, %arg2: i32) -> (i32, i32, i32) {
    %c0_i32 = arith.constant 0 : i32
    return %arg0, %arg2, %arg1 : i32, i32, i32
  }
}

</mosaic_0001>

<llo_original>
// kernel: tpu_custom_call.1
$region0: #{tpu_custom_call.1}
  #allocation0 [shape = 'u32[]', space=smem, size = 0x4, offset = 0x4, fixed_abs, tag = 'smem constant byte address 0x4 - core index']
  #allocation1 [shape = 'u32[144,128]{1,0:T(1,128)}', space=vmem, size = 0x12000, scoped, tag = 'internal scratch']
  %s0 = inlined_call_operand.hbm [shape: f32[2,4,256], index: 0, kind: input, shape index: {}]
  %s1 = inlined_call_operand.vmem [shape: f32[8,4], index: 1, kind: input, shape index: {}]
  %s2 = inlined_call_operand.hbm [shape: f32[2,8,256], index: 2, kind: output, shape index: {}]
  %s3 = sld [smem:[#allocation0]]
  $region45: #{tpu_custom_call.1} parent=0
    _
  %s5 = ssub.s32 1, %s3
  %s6 = scalar_select 0, %s5, %s3
  $region1: #{tpu_custom_call.1} parent=0
    #allocation2 [shape = 'u8[8192]{0}', space=vmem, size = 0x2000, scoped, tag = 'input window, operand 0']
    #allocation3 [shape = 's32[2]{0}', space=sflag, size = 0x8, scoped, tag = 'scoped memory for tpu_custom_call.1']
    #allocation4 [shape = 's32[2]{0}', space=sflag, size = 0x8, scoped, tag = 'scoped memory for tpu_custom_call.1']
    #allocation5 [shape = 'u8[16384]{0}', space=vmem, size = 0x4000, scoped, tag = 'output window, operand 0']
    %7 = vsyncpa [#allocation3], 0
    %s8 = scalar_lea.sflag [#allocation3], 1
    %9 = vsyncpa %s8, 0
    %10 = vsyncpa [#allocation4], 0
    %s11 = scalar_lea.sflag [#allocation4], 1
    %12 = vsyncpa %s11, 0
    loop: start=0, step=1, limit=4
    $region2: #{tpu_custom_call.1} parent=1 // loop_pre_header
      _
    $region3: #{tpu_custom_call.1} parent=1 // loop_header
      %s14 = sphi 0, %s18
      %p15 = scmp.ge.s32.totalorder %s14, 4
      %s21 = sphi 0, %s40
      %s22 = sphi 0, %s36
      %s23 = sphi 0, %s32
      %s24 = sphi 0, %s21
      %s25 = sphi 0, %s22
      %s26 = sphi 0, %s23
      %s27 = sphi 0, %s24
      %s28 = sphi 0, %s25
      %s29 = sphi 0, %s26
      %s45 = sphi 0, %s47
      %s48 = sphi 0, %s45
      %s49 = sphi 0, %s48
      %s65 = sphi 0, %s49
      %s71 = sphi 0, %s73
      %s74 = sphi 0, %s71
      %s75 = sphi 0, %s74
      %s91 = sphi 0, %s75
      %s101 = sphi 0, %s103
      %s104 = sphi 0, %s101
      %s105 = sphi 0, %s104
      %s121 = sphi 0, %s105
    $region4: #{tpu_custom_call.1} parent=1 // loop_header_branch
      %17 = sbr.rel (%p15) target = $region8
    $region5: #{tpu_custom_call.1} parent=1 // loop_body
      %s19 = ssub.s32 %s14, 1
      %s20 = ssub.s32 %s14, 2
      %s30 = sadd.s32 1, %s23
      %p31 = scmp.ge.s32.totalorder %s30, 1
      %s32 = scalar_select %p31, 0, %s30
      %s33 = sadd.s32 1, %s22
      %s34 = scalar_select %p31, %s33, %s22
      %p35 = scmp.ge.s32.totalorder %s34, 1
      %s36 = scalar_select %p35, 0, %s34
      %s37 = sadd.s32 1, %s21
      %s38 = scalar_select %p35, %s37, %s21
      %p39 = scmp.ge.s32.totalorder %s38, 2
      %s40 = scalar_select %p39, 0, %s38
      %s41 = ssub.s32 %s21, %s40
      %s42 = ssub.s32 %s22, %s36
      %s43 = sor.u32 %s41, %s42
      %p44 = scmp.eq.s32.totalorder %s43, 0
      %s46 = sadd.s32 %s45, 1
      %s47 = scalar_select %p44, %s45, %s46
      %p50 = pneg %p44
      %p51 = scmp.eq.s32.totalorder %s14, 1
      %p52 = por %p50, %p51
      %p53 = scmp.ne.s32.totalorder %s45, %s48
      %p54 = scmp.eq.s32.totalorder %s14, 0
      %p55 = por %p53, %p54
      %p56 = scmp.ne.s32.totalorder %s45, %s48
      %p57 = scmp.eq.s32.totalorder %s19, 1
      %p58 = por %p56, %p57
      %p59 = scmp.ne.s32.totalorder %s48, %s49
      %p60 = scmp.eq.s32.totalorder %s19, 0
      %p61 = por %p59, %p60
      %p62 = scmp.ne.s32.totalorder %s48, %s49
      %p63 = scmp.eq.s32.totalorder %s20, 1
      %p64 = por %p62, %p63
      %p66 = scmp.ne.s32.totalorder %s49, %s65
      %p67 = scmp.eq.s32.totalorder %s20, 0
      %p68 = por %p66, %p67
      %s69 = ssub.s32 %s23, %s32
      %p70 = scmp.eq.s32.totalorder %s69, 0
      %s72 = sadd.s32 %s71, 1
      %s73 = scalar_select %p70, %s71, %s72
      %p76 = pneg %p70
      %p77 = scmp.eq.s32.totalorder %s14, 1
      %p78 = por %p76, %p77
      %p79 = scmp.ne.s32.totalorder %s71, %s74
      %p80 = scmp.eq.s32.totalorder %s14, 0
      %p81 = por %p79, %p80
      %p82 = scmp.ne.s32.totalorder %s71, %s74
      %p83 = scmp.eq.s32.totalorder %s19, 1
      %p84 = por %p82, %p83
      %p85 = scmp.ne.s32.totalorder %s74, %s75
      %p86 = scmp.eq.s32.totalorder %s19, 0
      %p87 = por %p85, %p86
      %p88 = scmp.ne.s32.totalorder %s74, %s75
      %p89 = scmp.eq.s32.totalorder %s20, 1
      %p90 = por %p88, %p89
      %p92 = scmp.ne.s32.totalorder %s75, %s91
      %p93 = scmp.eq.s32.totalorder %s20, 0
      %p94 = por %p92, %p93
      %s95 = ssub.s32 %s21, %s40
      %s96 = ssub.s32 %s23, %s32
      %s97 = sor.u32 %s95, %s96
      %s98 = ssub.s32 %s22, %s36
      %s99 = sor.u32 %s97, %s98
      %p100 = scmp.eq.s32.totalorder %s99, 0
      %s102 = sadd.s32 %s101, 1
      %s103 = scalar_select %p100, %s101, %s102
      %p106 = pneg %p100
      %p107 = scmp.eq.s32.totalorder %s14, 1
      %p108 = por %p106, %p107
      %p109 = scmp.ne.s32.totalorder %s101, %s104
      %p110 = scmp.eq.s32.totalorder %s14, 0
      %p111 = por %p109, %p110
      %p112 = scmp.ne.s32.totalorder %s101, %s104
      %p113 = scmp.eq.s32.totalorder %s19, 1
      %p114 = por %p112, %p113
      %p115 = scmp.ne.s32.totalorder %s104, %s105
      %p116 = scmp.eq.s32.totalorder %s19, 0
      %p117 = por %p115, %p116
      %p118 = scmp.ne.s32.totalorder %s104, %s105
      %p119 = scmp.eq.s32.totalorder %s20, 1
      %p120 = por %p118, %p119
      %p122 = scmp.ne.s32.totalorder %s105, %s121
      %p123 = scmp.eq.s32.totalorder %s20, 0
      %p124 = por %p122, %p123
      %p125 = scmp.le.s32.totalorder 1, %s14
      %p126 = scmp.lt.s32.totalorder %s14, 3
      %p127 = pnand %p125, %p126
      %p128 = pneg %p127
      // Predicated region
      $region9: #{tpu_custom_call.1} parent=5 // pred_check
        _
      $region10: #{tpu_custom_call.1} parent=5 // pred_check_branch
        %130 = sbr.rel (%p127) target = $region12
      $region11: #{tpu_custom_call.1} parent=5 // pred_region
        %s131 = ssub.s32 %s14, 1
        // Predicated region
        $region13: #{tpu_custom_call.1} parent=11 // pred_check
          %p132 = pneg %p87
        $region14: #{tpu_custom_call.1} parent=11 // pred_check_branch
          %134 = sbr.rel (%p132) target = $region16
        $region15: #{tpu_custom_call.1} parent=11 // pred_region
          %p135 = scmp.lt.s32.totalorder %s26, 0
          %s136 = scalar_select %p135, %s26, 0
          %s137 = smul.addr %s136, 8
          %s138 = scalar_lea.vmem %s1, %s137
        $region16: #{tpu_custom_call.1} parent=11 // pred_fallthru
          _
      $region12: #{tpu_custom_call.1} parent=5 // pred_fallthru
        _
      %p139 = scmp.lt.s32.totalorder %s14, 2
      // Predicated region
      $region17: #{tpu_custom_call.1} parent=5 // pred_check
        %p140 = pneg %p139
      $region18: #{tpu_custom_call.1} parent=5 // pred_check_branch
        %142 = sbr.rel (%p140) target = $region20
      $region19: #{tpu_custom_call.1} parent=5 // pred_region
        // Predicated region
        $region21: #{tpu_custom_call.1} parent=19 // pred_check
          %p143 = pneg %p55
        $region22: #{tpu_custom_call.1} parent=19 // pred_check_branch
          %145 = sbr.rel (%p143) target = $region24
        $region23: #{tpu_custom_call.1} parent=19 // pred_region
          %s146 = sand.u32 %s45, 1
          %s147 = scalar_lea.sflag [#allocation3], %s146
          %s148 = sand.u32 %s45, 1
          %s149 = smul.addr %s148, 8
          %s150 = scalar_lea.vmem [#allocation2], %s149
          %s151 = smul.u32 2, %s22
          %s153 = ssub.s32 128, 128
          %154 = vsyncadd %s147, %s153
          %s155 = smul.addr %s21, 2
          %s156 = sadd.s32 %s151, %s155
          %s157 = smul.addr %s156, 64
          %s158 = scalar_lea.hbm %s0, %s157
          %s160 = sshll.u32 %s150, 4
          %s161 = int_to_ptr.vmem [resolvable:$true] %s160
          %163 = dma.hbm_to_vmem [thread:$0]  %s158, 128, %s161, %s147
        $region24: #{tpu_custom_call.1} parent=19 // pred_fallthru
          _
      $region20: #{tpu_custom_call.1} parent=5 // pred_fallthru
        _
      %p164 = scmp.le.s32.totalorder 1, %s14
      %p165 = scmp.lt.s32.totalorder %s14, 3
      %p166 = pnand %p164, %p165
      %p167 = pneg %p166
      // Predicated region
      $region25: #{tpu_custom_call.1} parent=5 // pred_check
        _
      $region26: #{tpu_custom_call.1} parent=5 // pred_check_branch
        %169 = sbr.rel (%p166) target = $region28
      $region27: #{tpu_custom_call.1} parent=5 // pred_region
        %s170 = ssub.s32 %s14, 1
        %s171 = sand.u32 %s48, 1
        %s172 = scalar_lea.sflag [#allocation3], %s171
        %s173 = sand.u32 %s48, 1
        %s174 = smul.addr %s173, 8
        %s175 = scalar_lea.vmem [#allocation2], %s174
        // Predicated region
        $region29: #{tpu_custom_call.1} parent=27 // pred_check
          %p176 = pneg %p61
        $region30: #{tpu_custom_call.1} parent=27 // pred_check_branch
          %178 = sbr.rel (%p176) target = $region32
        $region31: #{tpu_custom_call.1} parent=27 // pred_region
          %179 = dma.done %s172, 128
        $region32: #{tpu_custom_call.1} parent=27 // pred_fallthru
          _
        %s180 = sand.u32 %s48, 1
        %s181 = scalar_lea.sflag [#allocation3], %s180
        %s182 = sand.u32 %s48, 1
        %s183 = smul.addr %s182, 8
        %s184 = scalar_lea.vmem [#allocation2], %s183
        %p185 = pneg %p61
        %p186 = pneg %p58
        %p187 = scmp.lt.s32.totalorder %s26, 0
        %s188 = scalar_select %p187, %s26, 0
        %s189 = smul.addr %s188, 8
        %s190 = scalar_lea.vmem %s1, %s189
        %p191 = pneg %p87
        %p192 = pneg %p84
        %p193 = pneg %p117
        %p194 = pneg %p114
        %s195 = sand.u32 %s104, 1
        %s196 = scalar_lea.sflag [#allocation4], %s195
        %s197 = sand.u32 %s104, 1
        %s198 = smul.addr %s197, 16
        %s199 = scalar_lea.vmem [#allocation5], %s198
        %s200 = smul.u32 2, %s25
        %p201 = scmp.lt.s32.totalorder %s26, 0
        %s202 = scalar_select %p201, %s26, 0
        %s203 = smul.addr %s202, 8
        %s204 = scalar_lea.vmem %s1, %s203
        %s205 = smul.u32 2, %s25
        %v206 = vld [vmem:[%s204] sm:$0xff]
        %v207 = vld [vmem:[%s175] sm:$0xff]
        %v209 = vcombine.high %v207, %v207
        %vm210 = vcmask 31744
        %v212 = vsel %vm210, %v206, 0
        %vm214 = vcmask 1043456
        %v215 = vsel %vm214, %v207, 0
        %v217 = vsel %vm214, %v209, 0
        %219 = vmatprep.subr.mxu0 %v217
        %220 = vmatpush1.msra.mxu0 %v215
        %221 = vmatprep.subr.mxu0 0.0
        %222 = vmatpush1.msra.mxu0 0.0
        %223 = vmatprep.subr.mxu0 0.0
        %224 = vmatpush1.msra.mxu0 0.0
        %225 = vmatprep.subr.mxu0 0.0
        %226 = vmatpush1.msra.mxu0 0.0
        %227 = vmatprep.subr.mxu0 0.0
        %228 = vmatpush1.msra.mxu0 0.0
        %229 = vmatprep.subr.mxu0 0.0
        %230 = vmatpush1.msra.mxu0 0.0
        %231 = vmatprep.subr.mxu0 0.0
        %232 = vmatpush1.msra.mxu0 0.0
        %233 = vmatprep.subr.mxu0 0.0
        %234 = vmatpush1.msra.mxu0 0.0
        %235 = vmatprep.subr.mxu0 0.0
        %236 = vmatpush1.msra.mxu0 0.0
        %237 = vmatprep.subr.mxu0 0.0
        %238 = vmatpush1.msra.mxu0 0.0
        %239 = vmatprep.subr.mxu0 0.0
        %240 = vmatpush1.msra.mxu0 0.0
        %241 = vmatprep.subr.mxu0 0.0
        %242 = vmatpush1.msra.mxu0 0.0
        %243 = vmatprep.subr.mxu0 0.0
        %244 = vmatpush1.msra.mxu0 0.0
        %245 = vmatprep.subr.mxu0 0.0
        %246 = vmatpush1.msra.mxu0 0.0
        %247 = vmatprep.subr.mxu0 0.0
        %248 = vmatpush1.msra.mxu0 0.0
        %249 = vmatprep.subr.mxu0 0.0
        %250 = vmatpush1.msra.mxu0 0.0
        %251 = vmatprep.subr.mxu0 0.0
        %252 = vmatpush1.msra.mxu0 0.0
        %253 = vmatprep.subr.mxu0 0.0
        %254 = vmatpush1.msra.mxu0 0.0
        %255 = vmatprep.subr.mxu0 0.0
        %256 = vmatpush1.msra.mxu0 0.0
        %257 = vmatprep.subr.mxu0 0.0
        %258 = vmatpush1.msra.mxu0 0.0
        %259 = vmatprep.subr.mxu0 0.0
        %260 = vmatpush1.msra.mxu0 0.0
        %261 = vmatprep.subr.mxu0 0.0
        %262 = vmatpush1.msra.mxu0 0.0
        %263 = vmatprep.subr.mxu0 0.0
        %264 = vmatpush1.msra.mxu0 0.0
        %265 = vmatprep.subr.mxu0 0.0
        %266 = vmatpush1.msra.mxu0 0.0
        %267 = vmatprep.subr.mxu0 0.0
        %268 = vmatpush1.msra.mxu0 0.0
        %269 = vmatprep.subr.mxu0 0.0
        %270 = vmatpush1.msra.mxu0 0.0
        %271 = vmatprep.subr.mxu0 0.0
        %272 = vmatpush1.msra.mxu0 0.0
        %273 = vmatprep.subr.mxu0 0.0
        %274 = vmatpush1.msra.mxu0 0.0
        %275 = vmatprep.subr.mxu0 0.0
        %276 = vmatpush1.msra.mxu0 0.0
        %277 = vmatprep.subr.mxu0 0.0
        %278 = vmatpush1.msra.mxu0 0.0
        %279 = vmatprep.subr.mxu0 0.0
        %280 = vmatpush1.msra.mxu0 0.0
        %281 = vmatprep.subr.mxu0 0.0
        %282 = vmatpush1.msra.mxu0 0.0
        %283 = vmatprep.mubr.f32.mxu0 0.0
        %284 = vmatmul.mubr.f32.gmra.mrb[0].mxu0 %v212
        %v285 = vpop.f32.mrb[0].mxu0
        %v286 = vadd.f32 0.0, %v285
        %v287 = vpop.f32.mrb[0].mxu0
        %v288 = vadd.f32 0.0, %v287
        %289 = vdwg.mxu0
        %290 = vst [vmem:[%s199] sm:$0xff] %v286
        %291 = vst [vmem:[%s199 + $0x8] sm:$0xff] %v288
        %s292 = sand.u32 %s104, 1
        %s293 = scalar_lea.sflag [#allocation4], %s292
        %s294 = sand.u32 %s104, 1
        %s295 = smul.addr %s294, 16
        %s296 = scalar_lea.vmem [#allocation5], %s295
        // Predicated region
        $region33: #{tpu_custom_call.1} parent=27 // pred_check
          %p297 = pneg %p114
        $region34: #{tpu_custom_call.1} parent=27 // pred_check_branch
          %299 = sbr.rel (%p297) target = $region36
        $region35: #{tpu_custom_call.1} parent=27 // pred_region
          %s300 = smul.u32 2, %s25
          %s302 = ssub.s32 256, 256
          %303 = vsyncadd %s293, %s302
          %s304 = smul.addr %s26, 2
          %s305 = sadd.s32 %s300, %s304
          %s306 = smul.addr %s24, 2
          %s307 = sadd.s32 %s305, %s306
          %s308 = smul.addr %s307, 128
          %s309 = scalar_lea.hbm %s2, %s308
          %s311 = sshll.u32 %s296, 4
          %s312 = int_to_ptr.vmem [resolvable:$true] %s311
          %314 = dma.vmem_to_hbm [thread:$0]  %s312, 256, %s309, %s293
        $region36: #{tpu_custom_call.1} parent=27 // pred_fallthru
          _
      $region28: #{tpu_custom_call.1} parent=5 // pred_fallthru
        _
      %p315 = scmp.le.s32.totalorder 2, %s14
      // Predicated region
      $region37: #{tpu_custom_call.1} parent=5 // pred_check
        %p316 = pneg %p315
      $region38: #{tpu_custom_call.1} parent=5 // pred_check_branch
        %318 = sbr.rel (%p316) target = $region40
      $region39: #{tpu_custom_call.1} parent=5 // pred_region
        %s319 = ssub.s32 %s14, 2
        // Predicated region
        $region41: #{tpu_custom_call.1} parent=39 // pred_check
          %p320 = pneg %p120
        $region42: #{tpu_custom_call.1} parent=39 // pred_check_branch
          %322 = sbr.rel (%p320) target = $region44
        $region43: #{tpu_custom_call.1} parent=39 // pred_region
          %s323 = sand.u32 %s105, 1
          %s324 = scalar_lea.sflag [#allocation4], %s323
          %s325 = sand.u32 %s105, 1
          %s326 = smul.addr %s325, 16
          %s327 = scalar_lea.vmem [#allocation5], %s326
          %328 = dma.done %s324, 256
        $region44: #{tpu_custom_call.1} parent=39 // pred_fallthru
          _
      $region40: #{tpu_custom_call.1} parent=5 // pred_fallthru
        _
    $region6: #{tpu_custom_call.1} parent=1 // loop_footer
      %s18 = sadd.s32 1, %s14
    $region7: #{tpu_custom_call.1} parent=1 // loop_footer_branch
      %13 = sbr.rel target = $region3
    $region8: #{tpu_custom_call.1} parent=1 // loop_exit
      _
    %329 = vsyncpa [#allocation3], 1
    %s330 = scalar_lea.sflag [#allocation3], 1
    %331 = vsyncpa %s330, 1
    %332 = vsyncpa [#allocation4], 1
    %s333 = scalar_lea.sflag [#allocation4], 1
    %334 = vsyncpa %s333, 1

</llo_original>
